<compile_context>
chip_gen: v5e
topology: v5e:2x2
jax: 0.10.0
libtpu: 0.0.40
codegen_flags: <defaults>
</compile_context>

<pallas_src>
import functools

import jax
import jax.numpy as jnp
from jax.experimental import pallas as pl
from jax.experimental.pallas import tpu as pltpu


def _dice_partials_kernel(x_ref, t_ref, oi_ref, oz_ref, oy_ref,
                          cls_ref, acc_i, acc_z, acc_y,
                          *, n_classes, tile, apply_softmax):
    n = pl.program_id(1)                       # pixel-tile (reduction) index

    @pl.when(n == 0)
    def _init():
        # class ids 0..C-1, hoisted: built once per batch, not once per tile
        cls_ref[...] = jax.lax.broadcasted_iota(jnp.int32, (n_classes, tile), 0)
        acc_i[...] = jnp.zeros_like(acc_i)
        acc_z[...] = jnp.zeros_like(acc_z)
        acc_y[...] = jnp.zeros_like(acc_y)

    x = x_ref[...].astype(jnp.float32)         # (C, tile) logits (native dtype in HBM)
    t = t_ref[...]                             # (1, tile) int32 labels in [0, C)

    if apply_softmax:
        m = jnp.max(x, axis=0, keepdims=True)  # per-pixel softmax over channels
        e = jnp.exp(x - m)
        s = e / jnp.sum(e, axis=0, keepdims=True)
    else:
        s = x

    mask = t == cls_ref[...]                   # (C, tile) one-hot (bool), sublane broadcast of t
    # full-width accumulators: pure VPU adds in the hot loop
    acc_i[...] += jnp.where(mask, s, 0.0)      # score * one_hot
    acc_z[...] += s * s                        # score^2
    acc_y[...] += mask.astype(jnp.float32)     # one_hot^2 == one_hot

    @pl.when(n == pl.num_programs(1) - 1)
    def _finalize():
        oi_ref[...] = acc_i[...].sum(axis=1, keepdims=True)   # (C, 1)
        oz_ref[...] = acc_z[...].sum(axis=1, keepdims=True)
        oy_ref[...] = acc_y[...].sum(axis=1, keepdims=True)


def _pick_tile(hw, max_tile):
    """Largest multiple-of-128 tile <= max_tile that divides hw."""
    t = min(max_tile, hw)
    t = (t // 128) * 128
    while t > 128 and hw % t != 0:
        t -= 128
    if t < 128 or hw % t != 0:
        # TODO(synk): masked tail handling for H*W not divisible by a 128-multiple
        raise ValueError(f"H*W={hw} must be divisible by some multiple-of-128 tile")
    return t


def dice_loss(inputs, target, n_classes, softmax=True, max_tile=4096):
    """Pallas implementation of DiceLoss.forward.

    inputs : [B, C, H, W] logits (any float dtype; cast to f32 inside the kernel)
    target : [B, H, W] integer labels in [0, n_classes)
    """
    B, C, H, W = inputs.shape
    assert C == n_classes, "channel dim must equal n_classes"
    assert n_classes > 1, "DiceLoss averages over classes 1..n_classes-1"
    HW = H * W
    tile = _pick_tile(HW, max_tile)

    # Native NCHW layout — free reshapes only (no extra HBM pass).
    x = inputs.reshape(B, C, HW)
    t = target.reshape(B, 1, HW)
    if t.dtype != jnp.int32:
        t = t.astype(jnp.int32)

    kernel = functools.partial(
        _dice_partials_kernel, n_classes=C, tile=tile, apply_softmax=softmax)

    partial_shape = jax.ShapeDtypeStruct((B, C, 1), jnp.float32)
    out_block = pl.BlockSpec((None, C, 1), lambda b, n: (b, 0, 0))

    oi, oz, oy = pl.pallas_call(
        kernel,
        out_shape=(partial_shape, partial_shape, partial_shape),
        grid_spec=pltpu.PrefetchScalarGridSpec(
            num_scalar_prefetch=0,
            grid=(B, HW // tile),
            in_specs=[
                pl.BlockSpec((None, C, tile), lambda b, n: (b, 0, n)),   # logits tile
                pl.BlockSpec((None, 1, tile), lambda b, n: (b, 0, n)),   # label tile
            ],
            out_specs=(out_block, out_block, out_block),
            scratch_shapes=[
                pltpu.VMEM((C, tile), jnp.int32),    # hoisted class-id constant
                pltpu.VMEM((C, tile), jnp.float32),  # intersect accumulator
                pltpu.VMEM((C, tile), jnp.float32),  # z_sum accumulator
                pltpu.VMEM((C, tile), jnp.float32),  # y_sum accumulator
            ],
        ),
        compiler_params=pltpu.CompilerParams(
            # batch axis parallel (both TCs on v7x); pixel axis is the reduction
            dimension_semantics=("parallel", "arbitrary"),
        ),
    )(x, t)

    # Tiny O(B*C) combine in plain JAX: sum partials over batch, then dice per class,
    # skipping class 0 and averaging over the remaining n_classes-1 classes.
    smooth = 1e-5
    inter = oi[:, :, 0].sum(axis=0)          # (C,)
    z_sum = oz[:, :, 0].sum(axis=0)
    y_sum = oy[:, :, 0].sum(axis=0)
    dice = 1.0 - 2.0 * inter / (z_sum + y_sum + smooth)
    return dice[1:].sum() / (n_classes - 1)


def dice_loss_ref(inputs, target, n_classes, softmax=True):
    """Pure-JAX reference matching the PyTorch DiceLoss.forward."""
    s = jax.nn.softmax(inputs, axis=1) if softmax else inputs
    smooth = 1e-5
    loss = 0.0
    for i in range(1, n_classes):
        tgt = (target == i).astype(jnp.float32)
        sc = s[:, i].astype(jnp.float32)
        inter = jnp.sum(sc * tgt)
        y_sum = jnp.sum(tgt * tgt)
        z_sum = jnp.sum(sc * sc)
        loss += 1.0 - 2.0 * inter / (z_sum + y_sum + smooth)
    return loss / (n_classes - 1)


if __name__ == "__main__":
    key = jax.random.PRNGKey(0)
    k1, k2 = jax.random.split(key)

    B, C, H, W = 2, 4, 16, 16
    inputs = jax.random.normal(k1, (B, C, H, W), dtype=jnp.float32)
    # integer labels in [0, C); class 0 is background (excluded from the loss)
    target = jax.random.randint(k2, (B, H, W), 0, C, dtype=jnp.int32)

    loss = jax.block_until_ready(dice_loss(inputs, target, n_classes=C, softmax=True))
    ref = jax.block_until_ready(dice_loss_ref(inputs, target, n_classes=C, softmax=True))

    assert jnp.allclose(loss, ref, rtol=1e-5, atol=1e-5), (loss, ref)
    print("KERNEL_OK")
</pallas_src>

<mosaic_0001>
module attributes {stable_mosaic.version = 11 : i64} {
  func.func @_dice_partials_kernel(%arg0: i32, %arg1: i32, %arg2: memref<1x4x256xf32, #tpu.memory_space<vmem>>, %arg3: memref<1x1x256xi32, #tpu.memory_space<vmem>>, %arg4: memref<1x4x1xf32, #tpu.memory_space<vmem>>, %arg5: memref<1x4x1xf32, #tpu.memory_space<vmem>>, %arg6: memref<1x4x1xf32, #tpu.memory_space<vmem>>, %arg7: memref<4x256xi32, #tpu.memory_space<vmem>>, %arg8: memref<4x256xf32, #tpu.memory_space<vmem>>, %arg9: memref<4x256xf32, #tpu.memory_space<vmem>>, %arg10: memref<4x256xf32, #tpu.memory_space<vmem>>) attributes {dimension_semantics = [#tpu.dimension_semantics<parallel>, #tpu.dimension_semantics<arbitrary>], iteration_bounds = array<i64: 2, 1>, scalar_prefetch = 0 : i64, scratch_operands = 4 : i64, tpu.core_type = #tpu.core_type<tc>, window_params = [{transform_indices = @transform_0, window_bounds = array<i64: 1, 4, 256>}, {transform_indices = @transform_1, window_bounds = array<i64: 1, 1, 256>}, {transform_indices = @transform_2, window_bounds = array<i64: 1, 4, 1>}, {transform_indices = @transform_3, window_bounds = array<i64: 1, 4, 1>}, {transform_indices = @transform_4, window_bounds = array<i64: 1, 4, 1>}]} {
    %c0_i32 = arith.constant 0 : i32
    %0 = arith.cmpi eq, %arg1, %c0_i32 : i32
    %1 = arith.extui %0 : i1 to i32
    %c0_i32_0 = arith.constant 0 : i32
    %2 = arith.cmpi ne, %1, %c0_i32_0 : i32
    scf.if %2 {
      %36 = tpu.iota {dimensions = array<i32: 0>} : vector<4x256xi32>
      %c0_24 = arith.constant 0 : index
      %c0_25 = arith.constant 0 : index
      %37 = vector.load %arg7[%c0_24, %c0_25] : memref<4x256xi32, #tpu.memory_space<vmem>>, vector<4x256xi32>
      tpu.vector_store %arg7[%c0_24, %c0_25], %36 {strides = array<i32>} : memref<4x256xi32, #tpu.memory_space<vmem>>, vector<4x256xi32>,
      %cst_26 = arith.constant 0.000000e+00 : f32
      %38 = vector.broadcast %cst_26 : f32 to vector<4x256xf32>
      %c0_27 = arith.constant 0 : index
      %c0_28 = arith.constant 0 : index
      %39 = vector.load %arg8[%c0_27, %c0_28] : memref<4x256xf32, #tpu.memory_space<vmem>>, vector<4x256xf32>
      tpu.vector_store %arg8[%c0_27, %c0_28], %38 {strides = array<i32>} : memref<4x256xf32, #tpu.memory_space<vmem>>, vector<4x256xf32>,
      %cst_29 = arith.constant 0.000000e+00 : f32
      %40 = vector.broadcast %cst_29 : f32 to vector<4x256xf32>
      %c0_30 = arith.constant 0 : index
      %c0_31 = arith.constant 0 : index
      %41 = vector.load %arg9[%c0_30, %c0_31] : memref<4x256xf32, #tpu.memory_space<vmem>>, vector<4x256xf32>
      tpu.vector_store %arg9[%c0_30, %c0_31], %40 {strides = array<i32>} : memref<4x256xf32, #tpu.memory_space<vmem>>, vector<4x256xf32>,
      %cst_32 = arith.constant 0.000000e+00 : f32
      %42 = vector.broadcast %cst_32 : f32 to vector<4x256xf32>
      %c0_33 = arith.constant 0 : index
      %c0_34 = arith.constant 0 : index
      %43 = vector.load %arg10[%c0_33, %c0_34] : memref<4x256xf32, #tpu.memory_space<vmem>>, vector<4x256xf32>
      tpu.vector_store %arg10[%c0_33, %c0_34], %42 {strides = array<i32>} : memref<4x256xf32, #tpu.memory_space<vmem>>, vector<4x256xf32>,
    } else {
    }
    %c0 = arith.constant 0 : index
    %c0_1 = arith.constant 0 : index
    %c0_2 = arith.constant 0 : index
    %3 = vector.load %arg2[%c0, %c0_1, %c0_2] : memref<1x4x256xf32, #tpu.memory_space<vmem>>, vector<1x4x256xf32>
    %4 = vector.shape_cast %3 : vector<1x4x256xf32> to vector<4x256xf32>
    %c0_3 = arith.constant 0 : index
    %c0_4 = arith.constant 0 : index
    %c0_5 = arith.constant 0 : index
    %5 = vector.load %arg3[%c0_3, %c0_4, %c0_5] : memref<1x1x256xi32, #tpu.memory_space<vmem>>, vector<1x1x256xi32>
    %6 = vector.shape_cast %5 : vector<1x1x256xi32> to vector<1x256xi32>
    %cst = arith.constant dense<0xFF800000> : vector<256xf32>
    %7 = vector.multi_reduction <maximumf>, %4, %cst [0] : vector<4x256xf32> to vector<256xf32>
    %8 = vector.shape_cast %7 : vector<256xf32> to vector<1x256xf32>
    %9 = vector.broadcast %8 : vector<1x256xf32> to vector<4x256xf32>
    %10 = arith.subf %4, %9 : vector<4x256xf32>
    %11 = math.exp %10 : vector<4x256xf32>
    %cst_6 = arith.constant dense<0.000000e+00> : vector<256xf32>
    %12 = vector.multi_reduction <add>, %11, %cst_6 [0] : vector<4x256xf32> to vector<256xf32>
    %13 = vector.shape_cast %12 : vector<256xf32> to vector<1x256xf32>
    %14 = vector.broadcast %13 : vector<1x256xf32> to vector<4x256xf32>
    %15 = arith.divf %11, %14 : vector<4x256xf32>
    %c0_7 = arith.constant 0 : index
    %c0_8 = arith.constant 0 : index
    %16 = vector.load %arg7[%c0_7, %c0_8] : memref<4x256xi32, #tpu.memory_space<vmem>>, vector<4x256xi32>
    %17 = vector.broadcast %6 : vector<1x256xi32> to vector<4x256xi32>
    %18 = arith.cmpi eq, %17, %16 : vector<4x256xi32>
    %c0_9 = arith.constant 0 : index
    %c0_10 = arith.constant 0 : index
    %19 = vector.load %arg8[%c0_9, %c0_10] : memref<4x256xf32, #tpu.memory_space<vmem>>, vector<4x256xf32>
    %cst_11 = arith.constant 0.000000e+00 : f32
    %20 = vector.broadcast %cst_11 : f32 to vector<4x256xf32>
    %21 = arith.select %18, %15, %20 : vector<4x256xi1>, vector<4x256xf32>
    %22 = arith.addf %19, %21 : vector<4x256xf32>
    %c0_12 = arith.constant 0 : index
    %c0_13 = arith.constant 0 : index
    %23 = vector.load %arg8[%c0_12, %c0_13] : memref<4x256xf32, #tpu.memory_space<vmem>>, vector<4x256xf32>
    tpu.vector_store %arg8[%c0_12, %c0_13], %22 {strides = array<i32>} : memref<4x256xf32, #tpu.memory_space<vmem>>, vector<4x256xf32>,
    %c0_14 = arith.constant 0 : index
    %c0_15 = arith.constant 0 : index
    %24 = vector.load %arg9[%c0_14, %c0_15] : memref<4x256xf32, #tpu.memory_space<vmem>>, vector<4x256xf32>
    %25 = arith.mulf %15, %15 : vector<4x256xf32>
    %26 = arith.addf %24, %25 : vector<4x256xf32>
    %c0_16 = arith.constant 0 : index
    %c0_17 = arith.constant 0 : index
    %27 = vector.load %arg9[%c0_16, %c0_17] : memref<4x256xf32, #tpu.memory_space<vmem>>, vector<4x256xf32>
    tpu.vector_store %arg9[%c0_16, %c0_17], %26 {strides = array<i32>} : memref<4x256xf32, #tpu.memory_space<vmem>>, vector<4x256xf32>,
    %c0_18 = arith.constant 0 : index
    %c0_19 = arith.constant 0 : index
    %28 = vector.load %arg10[%c0_18, %c0_19] : memref<4x256xf32, #tpu.memory_space<vmem>>, vector<4x256xf32>
    %29 = arith.extui %18 : vector<4x256xi1> to vector<4x256xi32>
    %30 = arith.sitofp %29 : vector<4x256xi32> to vector<4x256xf32>
    %31 = arith.addf %28, %30 : vector<4x256xf32>
    %c0_20 = arith.constant 0 : index
    %c0_21 = arith.constant 0 : index
    %32 = vector.load %arg10[%c0_20, %c0_21] : memref<4x256xf32, #tpu.memory_space<vmem>>, vector<4x256xf32>
    tpu.vector_store %arg10[%c0_20, %c0_21], %31 {strides = array<i32>} : memref<4x256xf32, #tpu.memory_space<vmem>>, vector<4x256xf32>,
    %c0_i32_22 = arith.constant 0 : i32
    %33 = arith.cmpi eq, %arg1, %c0_i32_22 : i32
    %34 = arith.extui %33 : i1 to i32
    %c0_i32_23 = arith.constant 0 : i32
    %35 = arith.cmpi ne, %34, %c0_i32_23 : i32
    scf.if %35 {
      %c0_24 = arith.constant 0 : index
      %c0_25 = arith.constant 0 : index
      %36 = vector.load %arg8[%c0_24, %c0_25] : memref<4x256xf32, #tpu.memory_space<vmem>>, vector<4x256xf32>
      %cst_26 = arith.constant dense<0.000000e+00> : vector<4xf32>
      %37 = vector.multi_reduction <add>, %36, %cst_26 [1] : vector<4x256xf32> to vector<4xf32>
      %38 = vector.shape_cast %37 : vector<4xf32> to vector<4x1xf32>
      %c0_27 = arith.constant 0 : index
      %c0_28 = arith.constant 0 : index
      %c0_29 = arith.constant 0 : index
      %39 = vector.load %arg4[%c0_27, %c0_28, %c0_29] : memref<1x4x1xf32, #tpu.memory_space<vmem>>, vector<1x4x1xf32>
      %40 = vector.shape_cast %39 : vector<1x4x1xf32> to vector<4x1xf32>
      %41 = vector.shape_cast %38 : vector<4x1xf32> to vector<1x4x1xf32>
      tpu.vector_store %arg4[%c0_27, %c0_28, %c0_29], %41 {strides = array<i32>} : memref<1x4x1xf32, #tpu.memory_space<vmem>>, vector<1x4x1xf32>,
      %c0_30 = arith.constant 0 : index
      %c0_31 = arith.constant 0 : index
      %42 = vector.load %arg9[%c0_30, %c0_31] : memref<4x256xf32, #tpu.memory_space<vmem>>, vector<4x256xf32>
      %cst_32 = arith.constant dense<0.000000e+00> : vector<4xf32>
      %43 = vector.multi_reduction <add>, %42, %cst_32 [1] : vector<4x256xf32> to vector<4xf32>
      %44 = vector.shape_cast %43 : vector<4xf32> to vector<4x1xf32>
      %c0_33 = arith.constant 0 : index
      %c0_34 = arith.constant 0 : index
      %c0_35 = arith.constant 0 : index
      %45 = vector.load %arg5[%c0_33, %c0_34, %c0_35] : memref<1x4x1xf32, #tpu.memory_space<vmem>>, vector<1x4x1xf32>
      %46 = vector.shape_cast %45 : vector<1x4x1xf32> to vector<4x1xf32>
      %47 = vector.shape_cast %44 : vector<4x1xf32> to vector<1x4x1xf32>
      tpu.vector_store %arg5[%c0_33, %c0_34, %c0_35], %47 {strides = array<i32>} : memref<1x4x1xf32, #tpu.memory_space<vmem>>, vector<1x4x1xf32>,
      %c0_36 = arith.constant 0 : index
      %c0_37 = arith.constant 0 : index
      %48 = vector.load %arg10[%c0_36, %c0_37] : memref<4x256xf32, #tpu.memory_space<vmem>>, vector<4x256xf32>
      %cst_38 = arith.constant dense<0.000000e+00> : vector<4xf32>
      %49 = vector.multi_reduction <add>, %48, %cst_38 [1] : vector<4x256xf32> to vector<4xf32>
      %50 = vector.shape_cast %49 : vector<4xf32> to vector<4x1xf32>
      %c0_39 = arith.constant 0 : index
      %c0_40 = arith.constant 0 : index
      %c0_41 = arith.constant 0 : index
      %51 = vector.load %arg6[%c0_39, %c0_40, %c0_41] : memref<1x4x1xf32, #tpu.memory_space<vmem>>, vector<1x4x1xf32>
      %52 = vector.shape_cast %51 : vector<1x4x1xf32> to vector<4x1xf32>
      %53 = vector.shape_cast %50 : vector<4x1xf32> to vector<1x4x1xf32>
      tpu.vector_store %arg6[%c0_39, %c0_40, %c0_41], %53 {strides = array<i32>} : memref<1x4x1xf32, #tpu.memory_space<vmem>>, vector<1x4x1xf32>,
    } else {
    }
    return
  }
  func.func @transform_0(%arg0: i32, %arg1: i32) -> (i32, i32, i32) {
    %c0_i32 = arith.constant 0 : i32
    %c0_i32_0 = arith.constant 0 : i32
    return %arg0, %c0_i32, %arg1 : i32, i32, i32
  }
  func.func @transform_1(%arg0: i32, %arg1: i32) -> (i32, i32, i32) {
    %c0_i32 = arith.constant 0 : i32
    %c0_i32_0 = arith.constant 0 : i32
    return %arg0, %c0_i32, %arg1 : i32, i32, i32
  }
  func.func @transform_2(%arg0: i32, %arg1: i32) -> (i32, i32, i32) {
    %c0_i32 = arith.constant 0 : i32
    %c0_i32_0 = arith.constant 0 : i32
    %c0_i32_1 = arith.constant 0 : i32
    return %arg0, %c0_i32, %c0_i32_0 : i32, i32, i32
  }
  func.func @transform_3(%arg0: i32, %arg1: i32) -> (i32, i32, i32) {
    %c0_i32 = arith.constant 0 : i32
    %c0_i32_0 = arith.constant 0 : i32
    %c0_i32_1 = arith.constant 0 : i32
    return %arg0, %c0_i32, %c0_i32_0 : i32, i32, i32
  }
  func.func @transform_4(%arg0: i32, %arg1: i32) -> (i32, i32, i32) {
    %c0_i32 = arith.constant 0 : i32
    %c0_i32_0 = arith.constant 0 : i32
    %c0_i32_1 = arith.constant 0 : i32
    return %arg0, %c0_i32, %c0_i32_0 : i32, i32, i32
  }
}

</mosaic_0001>

<llo_original>
// kernel: tpu_custom_call.1
$region0: #{tpu_custom_call.1}
  #allocation0 [shape = 'u32[]', space=smem, size = 0x4, offset = 0x4, fixed_abs, tag = 'smem constant byte address 0x4 - core index']
  #allocation1 [shape = 'u32[72,128]{1,0:T(1,128)}', space=vmem, size = 0x9000, scoped, tag = 'internal scratch']
  #allocation2 [shape = 's32[4,256]{1,0:T(4,128)}', space=vmem, size = 0x1000, scoped, tag = 'scratch operand']
  #allocation3 [shape = 'f32[4,256]{1,0:T(4,128)}', space=vmem, size = 0x1000, scoped, tag = 'scratch operand']
  #allocation4 [shape = 'f32[4,256]{1,0:T(4,128)}', space=vmem, size = 0x1000, scoped, tag = 'scratch operand']
  #allocation5 [shape = 'f32[4,256]{1,0:T(4,128)}', space=vmem, size = 0x1000, scoped, tag = 'scratch operand']
  %s0 = inlined_call_operand.hbm [shape: f32[2,4,256], index: 0, kind: input, shape index: {}]
  %s1 = inlined_call_operand.hbm [shape: s32[2,1,256], index: 1, kind: input, shape index: {}]
  %s2 = inlined_call_operand.vmem [shape: f32[2,4,1], index: 2, kind: output, shape index: {0}]
  %s3 = inlined_call_operand.vmem [shape: f32[2,4,1], index: 3, kind: output, shape index: {1}]
  %s4 = inlined_call_operand.vmem [shape: f32[2,4,1], index: 4, kind: output, shape index: {2}]
  %5 = xla_tuple %s2, %s3, %s4
  %s6 = sld [smem:[#allocation0]]
  $region73: #{tpu_custom_call.1} parent=0
    _
  %s8 = ssub.s32 1, %s6
  %s9 = scalar_select 0, %s8, %s6
  $region1: #{tpu_custom_call.1} parent=0
    #allocation6 [shape = 'u8[8192]{0}', space=vmem, size = 0x2000, scoped, tag = 'input window, operand 0']
    #allocation7 [shape = 's32[2]{0}', space=sflag, size = 0x8, scoped, tag = 'scoped memory for tpu_custom_call.1']
    #allocation8 [shape = 'u8[2048]{0}', space=vmem, size = 0x800, scoped, tag = 'input window, operand 1']
    #allocation9 [shape = 's32[2]{0}', space=sflag, size = 0x8, scoped, tag = 'scoped memory for tpu_custom_call.1']
    %10 = vsyncpa [#allocation7], 0
    %s11 = scalar_lea.sflag [#allocation7], 1
    %12 = vsyncpa %s11, 0
    %13 = vsyncpa [#allocation9], 0
    %s14 = scalar_lea.sflag [#allocation9], 1
    %15 = vsyncpa %s14, 0
    loop: start=0, step=1, limit=4
    $region2: #{tpu_custom_call.1} parent=1 // loop_pre_header
      _
    $region3: #{tpu_custom_call.1} parent=1 // loop_header
      %s17 = sphi 0, %s21
      %p18 = scmp.ge.s32.totalorder %s17, 4
      %s24 = sphi 0, %s36
      %s25 = sphi 0, %s32
      %s26 = sphi 0, %s24
      %s27 = sphi 0, %s25
      %s28 = sphi 0, %s26
      %s29 = sphi 0, %s27
      %s41 = sphi 0, %s43
      %s44 = sphi 0, %s41
      %s45 = sphi 0, %s44
      %s61 = sphi 0, %s45
      %s69 = sphi 0, %s71
      %s72 = sphi 0, %s69
      %s73 = sphi 0, %s72
      %s89 = sphi 0, %s73
      %s95 = sphi 0, %s97
      %s98 = sphi 0, %s95
      %s99 = sphi 0, %s98
      %s115 = sphi 0, %s99
      %s121 = sphi 0, %s123
      %s124 = sphi 0, %s121
      %s125 = sphi 0, %s124
      %s141 = sphi 0, %s125
      %s147 = sphi 0, %s149
      %s150 = sphi 0, %s147
      %s151 = sphi 0, %s150
      %s167 = sphi 0, %s151
    $region4: #{tpu_custom_call.1} parent=1 // loop_header_branch
      %20 = sbr.rel (%p18) target = $region8
    $region5: #{tpu_custom_call.1} parent=1 // loop_body
      %s22 = ssub.s32 %s17, 1
      %s23 = ssub.s32 %s17, 2
      %s30 = sadd.s32 1, %s25
      %p31 = scmp.ge.s32.totalorder %s30, 1
      %s32 = scalar_select %p31, 0, %s30
      %s33 = sadd.s32 1, %s24
      %s34 = scalar_select %p31, %s33, %s24
      %p35 = scmp.ge.s32.totalorder %s34, 2
      %s36 = scalar_select %p35, 0, %s34
      %s37 = ssub.s32 %s24, %s36
      %s38 = ssub.s32 %s25, %s32
      %s39 = sor.u32 %s37, %s38
      %p40 = scmp.eq.s32.totalorder %s39, 0
      %s42 = sadd.s32 %s41, 1
      %s43 = scalar_select %p40, %s41, %s42
      %p46 = pneg %p40
      %p47 = scmp.eq.s32.totalorder %s17, 1
      %p48 = por %p46, %p47
      %p49 = scmp.ne.s32.totalorder %s41, %s44
      %p50 = scmp.eq.s32.totalorder %s17, 0
      %p51 = por %p49, %p50
      %p52 = scmp.ne.s32.totalorder %s41, %s44
      %p53 = scmp.eq.s32.totalorder %s22, 1
      %p54 = por %p52, %p53
      %p55 = scmp.ne.s32.totalorder %s44, %s45
      %p56 = scmp.eq.s32.totalorder %s22, 0
      %p57 = por %p55, %p56
      %p58 = scmp.ne.s32.totalorder %s44, %s45
      %p59 = scmp.eq.s32.totalorder %s23, 1
      %p60 = por %p58, %p59
      %p62 = scmp.ne.s32.totalorder %s45, %s61
      %p63 = scmp.eq.s32.totalorder %s23, 0
      %p64 = por %p62, %p63
      %s65 = ssub.s32 %s24, %s36
      %s66 = ssub.s32 %s25, %s32
      %s67 = sor.u32 %s65, %s66
      %p68 = scmp.eq.s32.totalorder %s67, 0
      %s70 = sadd.s32 %s69, 1
      %s71 = scalar_select %p68, %s69, %s70
      %p74 = pneg %p68
      %p75 = scmp.eq.s32.totalorder %s17, 1
      %p76 = por %p74, %p75
      %p77 = scmp.ne.s32.totalorder %s69, %s72
      %p78 = scmp.eq.s32.totalorder %s17, 0
      %p79 = por %p77, %p78
      %p80 = scmp.ne.s32.totalorder %s69, %s72
      %p81 = scmp.eq.s32.totalorder %s22, 1
      %p82 = por %p80, %p81
      %p83 = scmp.ne.s32.totalorder %s72, %s73
      %p84 = scmp.eq.s32.totalorder %s22, 0
      %p85 = por %p83, %p84
      %p86 = scmp.ne.s32.totalorder %s72, %s73
      %p87 = scmp.eq.s32.totalorder %s23, 1
      %p88 = por %p86, %p87
      %p90 = scmp.ne.s32.totalorder %s73, %s89
      %p91 = scmp.eq.s32.totalorder %s23, 0
      %p92 = por %p90, %p91
      %s93 = ssub.s32 %s24, %s36
      %p94 = scmp.eq.s32.totalorder %s93, 0
      %s96 = sadd.s32 %s95, 1
      %s97 = scalar_select %p94, %s95, %s96
      %p100 = pneg %p94
      %p101 = scmp.eq.s32.totalorder %s17, 1
      %p102 = por %p100, %p101
      %p103 = scmp.ne.s32.totalorder %s95, %s98
      %p104 = scmp.eq.s32.totalorder %s17, 0
      %p105 = por %p103, %p104
      %p106 = scmp.ne.s32.totalorder %s95, %s98
      %p107 = scmp.eq.s32.totalorder %s22, 1
      %p108 = por %p106, %p107
      %p109 = scmp.ne.s32.totalorder %s98, %s99
      %p110 = scmp.eq.s32.totalorder %s22, 0
      %p111 = por %p109, %p110
      %p112 = scmp.ne.s32.totalorder %s98, %s99
      %p113 = scmp.eq.s32.totalorder %s23, 1
      %p114 = por %p112, %p113
      %p116 = scmp.ne.s32.totalorder %s99, %s115
      %p117 = scmp.eq.s32.totalorder %s23, 0
      %p118 = por %p116, %p117
      %s119 = ssub.s32 %s24, %s36
      %p120 = scmp.eq.s32.totalorder %s119, 0
      %s122 = sadd.s32 %s121, 1
      %s123 = scalar_select %p120, %s121, %s122
      %p126 = pneg %p120
      %p127 = scmp.eq.s32.totalorder %s17, 1
      %p128 = por %p126, %p127
      %p129 = scmp.ne.s32.totalorder %s121, %s124
      %p130 = scmp.eq.s32.totalorder %s17, 0
      %p131 = por %p129, %p130
      %p132 = scmp.ne.s32.totalorder %s121, %s124
      %p133 = scmp.eq.s32.totalorder %s22, 1
      %p134 = por %p132, %p133
      %p135 = scmp.ne.s32.totalorder %s124, %s125
      %p136 = scmp.eq.s32.totalorder %s22, 0
      %p137 = por %p135, %p136
      %p138 = scmp.ne.s32.totalorder %s124, %s125
      %p139 = scmp.eq.s32.totalorder %s23, 1
      %p140 = por %p138, %p139
      %p142 = scmp.ne.s32.totalorder %s125, %s141
      %p143 = scmp.eq.s32.totalorder %s23, 0
      %p144 = por %p142, %p143
      %s145 = ssub.s32 %s24, %s36
      %p146 = scmp.eq.s32.totalorder %s145, 0
      %s148 = sadd.s32 %s147, 1
      %s149 = scalar_select %p146, %s147, %s148
      %p152 = pneg %p146
      %p153 = scmp.eq.s32.totalorder %s17, 1
      %p154 = por %p152, %p153
      %p155 = scmp.ne.s32.totalorder %s147, %s150
      %p156 = scmp.eq.s32.totalorder %s17, 0
      %p157 = por %p155, %p156
      %p158 = scmp.ne.s32.totalorder %s147, %s150
      %p159 = scmp.eq.s32.totalorder %s22, 1
      %p160 = por %p158, %p159
      %p161 = scmp.ne.s32.totalorder %s150, %s151
      %p162 = scmp.eq.s32.totalorder %s22, 0
      %p163 = por %p161, %p162
      %p164 = scmp.ne.s32.totalorder %s150, %s151
      %p165 = scmp.eq.s32.totalorder %s23, 1
      %p166 = por %p164, %p165
      %p168 = scmp.ne.s32.totalorder %s151, %s167
      %p169 = scmp.eq.s32.totalorder %s23, 0
      %p170 = por %p168, %p169
      %p171 = scmp.le.s32.totalorder 1, %s17
      %p172 = scmp.lt.s32.totalorder %s17, 3
      %p173 = pnand %p171, %p172
      %p174 = pneg %p173
      // Predicated region
      $region9: #{tpu_custom_call.1} parent=5 // pred_check
        _
      $region10: #{tpu_custom_call.1} parent=5 // pred_check_branch
        %176 = sbr.rel (%p173) target = $region12
      $region11: #{tpu_custom_call.1} parent=5 // pred_region
        %s177 = ssub.s32 %s17, 1
      $region12: #{tpu_custom_call.1} parent=5 // pred_fallthru
        _
      %p178 = scmp.lt.s32.totalorder %s17, 2
      // Predicated region
      $region13: #{tpu_custom_call.1} parent=5 // pred_check
        %p179 = pneg %p178
      $region14: #{tpu_custom_call.1} parent=5 // pred_check_branch
        %181 = sbr.rel (%p179) target = $region16
      $region15: #{tpu_custom_call.1} parent=5 // pred_region
        // Predicated region
        $region17: #{tpu_custom_call.1} parent=15 // pred_check
          %p182 = pneg %p51
        $region18: #{tpu_custom_call.1} parent=15 // pred_check_branch
          %184 = sbr.rel (%p182) target = $region20
        $region19: #{tpu_custom_call.1} parent=15 // pred_region
          %s185 = sand.u32 %s41, 1
          %s186 = scalar_lea.sflag [#allocation7], %s185
          %s187 = sand.u32 %s41, 1
          %s188 = smul.addr %s187, 8
          %s189 = scalar_lea.vmem [#allocation6], %s188
          %s190 = smul.u32 2, %s25
          %192 = vsyncadd %s186, 0
          %s193 = smul.addr %s24, 2
          %s194 = sadd.s32 %s190, %s193
          %s195 = smul.addr %s194, 4
          %s196 = scalar_lea.hbm %s0, %s195
          %s198 = sshll.u32 %s196, 4
          %s199 = int_to_ptr.hbm [resolvable:$true] %s198
          %s200 = sshll.u32 %s189, 4
          %s201 = int_to_ptr.vmem [resolvable:$true] %s200
          %203 = dma.hbm_to_vmem [thread:$0]  %s199, 128, %s201, %s186
        $region20: #{tpu_custom_call.1} parent=15 // pred_fallthru
          _
        // Predicated region
        $region21: #{tpu_custom_call.1} parent=15 // pred_check
          %p204 = pneg %p79
        $region22: #{tpu_custom_call.1} parent=15 // pred_check_branch
          %206 = sbr.rel (%p204) target = $region24
        $region23: #{tpu_custom_call.1} parent=15 // pred_region
          %s207 = sand.u32 %s69, 1
          %s208 = scalar_lea.sflag [#allocation9], %s207
          %s209 = sand.u32 %s69, 1
          %s210 = smul.addr %s209, 2
          %s211 = scalar_lea.vmem [#allocation8], %s210
          %s212 = smul.u32 2, %s25
          %214 = vsyncadd %s208, 0
          %s215 = smul.addr %s24, 2
          %s216 = sadd.s32 %s212, %s215
          %s217 = scalar_lea.hbm %s1, %s216
          %s219 = sshll.u32 %s217, 4
          %s220 = int_to_ptr.hbm [resolvable:$true] %s219
          %s221 = sshll.u32 %s211, 4
          %s222 = int_to_ptr.vmem [resolvable:$true] %s221
          %224 = dma.hbm_to_vmem [thread:$0]  %s220, 32, %s222, %s208
        $region24: #{tpu_custom_call.1} parent=15 // pred_fallthru
          _
      $region16: #{tpu_custom_call.1} parent=5 // pred_fallthru
        _
      %p225 = scmp.le.s32.totalorder 1, %s17
      %p226 = scmp.lt.s32.totalorder %s17, 3
      %p227 = pnand %p225, %p226
      %p228 = pneg %p227
      // Predicated region
      $region25: #{tpu_custom_call.1} parent=5 // pred_check
        _
      $region26: #{tpu_custom_call.1} parent=5 // pred_check_branch
        %230 = sbr.rel (%p227) target = $region28
      $region27: #{tpu_custom_call.1} parent=5 // pred_region
        %s231 = ssub.s32 %s17, 1
        %s232 = sand.u32 %s44, 1
        %s233 = scalar_lea.sflag [#allocation7], %s232
        %s234 = sand.u32 %s44, 1
        %s235 = smul.addr %s234, 8
        %s236 = scalar_lea.vmem [#allocation6], %s235
        // Predicated region
        $region29: #{tpu_custom_call.1} parent=27 // pred_check
          %p237 = pneg %p57
        $region30: #{tpu_custom_call.1} parent=27 // pred_check_branch
          %239 = sbr.rel (%p237) target = $region32
        $region31: #{tpu_custom_call.1} parent=27 // pred_region
          %241 = dma.done %s233, 128
        $region32: #{tpu_custom_call.1} parent=27 // pred_fallthru
          _
        %s242 = sand.u32 %s72, 1
        %s243 = scalar_lea.sflag [#allocation9], %s242
        %s244 = sand.u32 %s72, 1
        %s245 = smul.addr %s244, 2
        %s246 = scalar_lea.vmem [#allocation8], %s245
        // Predicated region
        $region33: #{tpu_custom_call.1} parent=27 // pred_check
          %p247 = pneg %p85
        $region34: #{tpu_custom_call.1} parent=27 // pred_check_branch
          %249 = sbr.rel (%p247) target = $region36
        $region35: #{tpu_custom_call.1} parent=27 // pred_region
          %251 = dma.done %s243, 32
        $region36: #{tpu_custom_call.1} parent=27 // pred_fallthru
          _
        %s252 = sand.u32 %s44, 1
        %s253 = scalar_lea.sflag [#allocation7], %s252
        %s254 = sand.u32 %s44, 1
        %s255 = smul.addr %s254, 8
        %s256 = scalar_lea.vmem [#allocation6], %s255
        %p257 = pneg %p57
        %p258 = pneg %p54
        %s259 = sand.u32 %s72, 1
        %s260 = scalar_lea.sflag [#allocation9], %s259
        %s261 = sand.u32 %s72, 1
        %s262 = smul.addr %s261, 2
        %s263 = scalar_lea.vmem [#allocation8], %s262
        %p264 = pneg %p85
        %p265 = pneg %p82
        %p266 = pneg %p111
        %p267 = pneg %p108
        %p268 = scmp.lt.s32.totalorder %s26, 1
        %s269 = scalar_select %p268, %s26, 1
        %s270 = smul.addr %s269, 4
        %s271 = scalar_lea.vmem %s2, %s270
        %p272 = pneg %p137
        %p273 = pneg %p134
        %p274 = scmp.lt.s32.totalorder %s26, 1
        %s275 = scalar_select %p274, %s26, 1
        %s276 = smul.addr %s275, 4
        %s277 = scalar_lea.vmem %s3, %s276
        %p278 = pneg %p163
        %p279 = pneg %p160
        %p280 = scmp.lt.s32.totalorder %s26, 1
        %s281 = scalar_select %p280, %s26, 1
        %s282 = smul.addr %s281, 4
        %s283 = scalar_lea.vmem %s4, %s282
        %s284 = smul.u32 2, %s27
        %s285 = smul.u32 2, %s27
        %p286 = scmp.lt.s32.totalorder %s26, 1
        %s287 = scalar_select %p286, %s26, 1
        %s288 = smul.addr %s287, 4
        %s289 = scalar_lea.vmem %s2, %s288
        %p290 = scmp.lt.s32.totalorder %s26, 1
        %s291 = scalar_select %p290, %s26, 1
        %s292 = smul.addr %s291, 4
        %s293 = scalar_lea.vmem %s3, %s292
        %p294 = scmp.lt.s32.totalorder %s26, 1
        %s295 = scalar_select %p294, %s26, 1
        %s296 = smul.addr %s295, 4
        %s297 = scalar_lea.vmem %s4, %s296
        %p298 = scmp.eq.s32.totalorder %s27, 0
        // Predicated region
        $region37: #{tpu_custom_call.1} parent=27 // pred_check
          %p299 = pneg %p298
        $region38: #{tpu_custom_call.1} parent=27 // pred_check_branch
          %301 = sbr.rel (%p299) target = $region40
        $region39: #{tpu_custom_call.1} parent=27 // pred_region
          %v302 = vlaneseq
          %v303 = vshrl.u32 %v302, 7
          %v305 = vunpack.c.l.s4 839922192
          %v306 = vunpack.c.0.s8 %v305
          %v307 = vperm.slane %v303, %v306
          %308 = vst [vmem:[#allocation2] sm:$0xff] %v307
          %309 = vst [vmem:[#allocation3] sm:$0xff] 0.0
          %310 = vst [vmem:[#allocation4] sm:$0xff] 0.0
          %311 = vst [vmem:[#allocation5] sm:$0xff] 0.0
        $region40: #{tpu_custom_call.1} parent=27 // pred_fallthru
          _
        %v312 = vld [vmem:[%s236] sm:$0xff]
        %v313 = vld [vmem:[%s246] sm:$0x3]
        %315 = vst [vmem:[#allocation1] ss:$2 sm:$0xff] %v312
        %v316 = vld.sshfl [vmem:[#allocation1] sm:$0xff pattern:$0x75316420]
        %v317 = vld.sshfl [vmem:[#allocation1 + $0x8] sm:$0xff pattern:$0x75316420]
        %vm320 = vcmask 1043456
        %v321 = vsel %vm320, %v316, -inf
        %v322 = vrot.slane %v321, 4
        %v323 = vmax.f32 %v321, %v322
        %v324 = vrot.slane %v323, 2
        %v325 = vmax.f32 %v323, %v324
        %v326 = vrot.slane %v325, 1
        %v327 = vmax.f32 %v325, %v326
        %v328 = vsel %vm320, %v317, -inf
        %v329 = vrot.slane %v328, 4
        %v330 = vmax.f32 %v328, %v329
        %v331 = vrot.slane %v330, 2
        %v332 = vmax.f32 %v330, %v331
        %v333 = vrot.slane %v332, 1
        %v334 = vmax.f32 %v332, %v333
        %v337 = vrot.slane %v334, 4
        %v338 = vsel %vm320, %v327, %v337
        %v340 = vsub.f32 %v312, %v338
        %v341 = vmul.f32 %v340, 1.442695
        %v342 = vpow.pop %v341
        %344 = vst [vmem:[#allocation1] ss:$2 sm:$0xff] %v342
        %v345 = vld.sshfl [vmem:[#allocation1] sm:$0xff pattern:$0x75316420]
        %v346 = vld.sshfl [vmem:[#allocation1 + $0x8] sm:$0xff pattern:$0x75316420]
        %v349 = vsel %vm320, %v345, 0.0
        %v350 = vrot.slane %v349, 4
        %v351 = vadd.f32 %v349, %v350
        %v352 = vrot.slane %v351, 2
        %v353 = vadd.f32 %v351, %v352
        %v354 = vrot.slane %v353, 1
        %v355 = vadd.f32 %v353, %v354
        %v356 = vsel %vm320, %v346, 0.0
        %v357 = vrot.slane %v356, 4
        %v358 = vadd.f32 %v356, %v357
        %v359 = vrot.slane %v358, 2
        %v360 = vadd.f32 %v358, %v359
        %v361 = vrot.slane %v360, 1
        %v362 = vadd.f32 %v360, %v361
        %v365 = vrot.slane %v362, 4
        %v366 = vsel %vm320, %v355, %v365
        %v368 = vrcp.pop %v366
        %v369 = vmul.f32 %v366, %v368
        %v370 = vsub.f32 1.0, %v369
        %v371 = vmul.f32 %v368, %v370
        %v372 = vadd.f32 %v368, %v371
        %vm373 = vweird.f32 %v366
        %vm374 = vweird.f32 %v368
        %vm375 = vmor %vm373, %vm374
        %v376 = vsel %vm375, %v368, %v372
        %v377 = vand.u32 2147483647, %v366
        %vm378 = vcmp.eq.f32.partialorder %v377, 8.507059e+37
        %v379 = vand.u32 %v366, 2147483648
        %v380 = vor.u32 1.1754944e-38, %v379
        %v381 = vsel %vm378, %v380, %v376
        %v382 = vmul.f32 %v342, %v381
        %v383 = vld [vmem:[#allocation2] sm:$0xff]
        %v384 = vperm.slane %v313, 0
        %v385 = vperm.slane %v313, 1
        %386 = vst [vmem:[#allocation1] ss:$2 sm:$0xff] %v383
        %v387 = vld.sshfl [vmem:[#allocation1] sm:$0xff pattern:$0x75316420]
        %v388 = vld.sshfl [vmem:[#allocation1 + $0x8] sm:$0xff pattern:$0x75316420]
        %vm389 = vcmp.eq.s32.totalorder %v384, %v387
        %vm390 = vcmp.eq.s32.totalorder %v385, %v388
        %v391 = vld [vmem:[#allocation3] sm:$0xff]
        %393 = vst [vmem:[#allocation1] ss:$2 sm:$0xff] %v382
        %v394 = vld.sshfl [vmem:[#allocation1] sm:$0xff pattern:$0x75316420]
        %v395 = vld.sshfl [vmem:[#allocation1 + $0x8] sm:$0xff pattern:$0x75316420]
        %v398 = vsel %vm389, %v394, 0.0
        %v399 = vsel %vm390, %v395, 0.0
        %v402 = vrot.slane %v399, 4
        %v403 = vsel %vm320, %v398, %v402
        %v405 = vadd.f32 %v391, %v403
        %406 = vst [vmem:[#allocation3] sm:$0xff] %v405
        %v407 = vld [vmem:[#allocation4] sm:$0xff]
        %v408 = vmul.f32 %v382, %v382
        %v409 = vadd.f32 %v407, %v408
        %410 = vst [vmem:[#allocation4] sm:$0xff] %v409
        %v411 = vld [vmem:[#allocation5] sm:$0xff]
        %v412 = vsel %vm389, 1, 0
        %v413 = vsel %vm390, 1, 0
        %v414 = vcvt.s32.f32 %v412
        %v415 = vcvt.s32.f32 %v413
        %v418 = vrot.slane %v415, 4
        %v419 = vsel %vm320, %v414, %v418
        %v421 = vadd.f32 %v411, %v419
        %422 = vst [vmem:[#allocation5] sm:$0xff] %v421
        // Predicated region
        $region41: #{tpu_custom_call.1} parent=27 // pred_check
          %p423 = pneg %p298
        $region42: #{tpu_custom_call.1} parent=27 // pred_check_branch
          %425 = sbr.rel (%p423) target = $region44
        $region43: #{tpu_custom_call.1} parent=27 // pred_region
          %v426 = vld [vmem:[#allocation3] sm:$0xff]
          %428 = vst [vmem:[#allocation1] ss:$2 sm:$0xff] %v426
          %v429 = vld.sshfl [vmem:[#allocation1] sm:$0xff pattern:$0x75316420]
          %v430 = vld.sshfl [vmem:[#allocation1 + $0x8] sm:$0xff pattern:$0x75316420]
          %v433 = vsel %vm320, %v429, 0.0
          %v434 = vsel %vm320, %v430, 0.0
          %v435 = vadd.f32 %v433, %v434
          %436 = vadd.xlane.f32.xlu0 %v435
          %v437 = vpop.xlane.xlu0 %436
          %vm438 = vcmask 3072
          %439 = vst.msk [vmem:[%s289] sm:$0xf] %vm438, %v437
          %v440 = vld [vmem:[#allocation4] sm:$0xff]
          %442 = vst [vmem:[#allocation1] ss:$2 sm:$0xff] %v440
          %v443 = vld.sshfl [vmem:[#allocation1] sm:$0xff pattern:$0x75316420]
          %v444 = vld.sshfl [vmem:[#allocation1 + $0x8] sm:$0xff pattern:$0x75316420]
          %v447 = vsel %vm320, %v443, 0.0
          %v448 = vsel %vm320, %v444, 0.0
          %v449 = vadd.f32 %v447, %v448
          %450 = vadd.xlane.f32.xlu0 %v449
          %v451 = vpop.xlane.xlu0 %450
          %452 = vst.msk [vmem:[%s293] sm:$0xf] %vm438, %v451
          %v453 = vld [vmem:[#allocation5] sm:$0xff]
          %455 = vst [vmem:[#allocation1] ss:$2 sm:$0xff] %v453
          %v456 = vld.sshfl [vmem:[#allocation1] sm:$0xff pattern:$0x75316420]
          %v457 = vld.sshfl [vmem:[#allocation1 + $0x8] sm:$0xff pattern:$0x75316420]
          %v460 = vsel %vm320, %v456, 0.0
          %v461 = vsel %vm320, %v457, 0.0
          %v462 = vadd.f32 %v460, %v461
          %463 = vadd.xlane.f32.xlu0 %v462
          %v464 = vpop.xlane.xlu0 %463
          %465 = vst.msk [vmem:[%s297] sm:$0xf] %vm438, %v464
        $region44: #{tpu_custom_call.1} parent=27 // pred_fallthru
          _
        %p466 = scmp.lt.s32.totalorder %s26, 1
        %s467 = scalar_select %p466, %s26, 1
        %s468 = smul.addr %s467, 4
        %s469 = scalar_lea.vmem %s2, %s468
        %p470 = scmp.lt.s32.totalorder %s26, 1
        %s471 = scalar_select %p470, %s26, 1
        %s472 = smul.addr %s471, 4
        %s473 = scalar_lea.vmem %s3, %s472
        %p474 = scmp.lt.s32.totalorder %s26, 1
        %s475 = scalar_select %p474, %s26, 1
        %s476 = smul.addr %s475, 4
        %s477 = scalar_lea.vmem %s4, %s476
        // Predicated region
        $region45: #{tpu_custom_call.1} parent=27 // pred_check
          %p478 = pneg %p108
        $region46: #{tpu_custom_call.1} parent=27 // pred_check_branch
          %480 = sbr.rel (%p478) target = $region48
        $region47: #{tpu_custom_call.1} parent=27 // pred_region
          _
        $region48: #{tpu_custom_call.1} parent=27 // pred_fallthru
          _
        // Predicated region
        $region49: #{tpu_custom_call.1} parent=27 // pred_check
          %p481 = pneg %p134
        $region50: #{tpu_custom_call.1} parent=27 // pred_check_branch
          %483 = sbr.rel (%p481) target = $region52
        $region51: #{tpu_custom_call.1} parent=27 // pred_region
          _
        $region52: #{tpu_custom_call.1} parent=27 // pred_fallthru
          _
        // Predicated region
        $region53: #{tpu_custom_call.1} parent=27 // pred_check
          %p484 = pneg %p160
        $region54: #{tpu_custom_call.1} parent=27 // pred_check_branch
          %486 = sbr.rel (%p484) target = $region56
        $region55: #{tpu_custom_call.1} parent=27 // pred_region
          _
        $region56: #{tpu_custom_call.1} parent=27 // pred_fallthru
          _
      $region28: #{tpu_custom_call.1} parent=5 // pred_fallthru
        _
      %p487 = scmp.le.s32.totalorder 2, %s17
      // Predicated region
      $region57: #{tpu_custom_call.1} parent=5 // pred_check
        %p488 = pneg %p487
      $region58: #{tpu_custom_call.1} parent=5 // pred_check_branch
        %490 = sbr.rel (%p488) target = $region60
      $region59: #{tpu_custom_call.1} parent=5 // pred_region
        %s491 = ssub.s32 %s17, 2
        // Predicated region
        $region61: #{tpu_custom_call.1} parent=59 // pred_check
          %p492 = pneg %p114
        $region62: #{tpu_custom_call.1} parent=59 // pred_check_branch
          %494 = sbr.rel (%p492) target = $region64
        $region63: #{tpu_custom_call.1} parent=59 // pred_region
          %p495 = scmp.lt.s32.totalorder %s28, 1
          %s496 = scalar_select %p495, %s28, 1
          %s497 = smul.addr %s496, 4
          %s498 = scalar_lea.vmem %s2, %s497
        $region64: #{tpu_custom_call.1} parent=59 // pred_fallthru
          _
        // Predicated region
        $region65: #{tpu_custom_call.1} parent=59 // pred_check
          %p499 = pneg %p140
        $region66: #{tpu_custom_call.1} parent=59 // pred_check_branch
          %501 = sbr.rel (%p499) target = $region68
        $region67: #{tpu_custom_call.1} parent=59 // pred_region
          %p502 = scmp.lt.s32.totalorder %s28, 1
          %s503 = scalar_select %p502, %s28, 1
          %s504 = smul.addr %s503, 4
          %s505 = scalar_lea.vmem %s3, %s504
        $region68: #{tpu_custom_call.1} parent=59 // pred_fallthru
          _
        // Predicated region
        $region69: #{tpu_custom_call.1} parent=59 // pred_check
          %p506 = pneg %p166
        $region70: #{tpu_custom_call.1} parent=59 // pred_check_branch
          %508 = sbr.rel (%p506) target = $region72
        $region71: #{tpu_custom_call.1} parent=59 // pred_region
          %p509 = scmp.lt.s32.totalorder %s28, 1
          %s510 = scalar_select %p509, %s28, 1
          %s511 = smul.addr %s510, 4
          %s512 = scalar_lea.vmem %s4, %s511
        $region72: #{tpu_custom_call.1} parent=59 // pred_fallthru
          _
      $region60: #{tpu_custom_call.1} parent=5 // pred_fallthru
        _
    $region6: #{tpu_custom_call.1} parent=1 // loop_footer
      %s21 = sadd.s32 1, %s17
    $region7: #{tpu_custom_call.1} parent=1 // loop_footer_branch
      %16 = sbr.rel target = $region3
    $region8: #{tpu_custom_call.1} parent=1 // loop_exit
      _
    %513 = vsyncpa [#allocation7], 1
    %s514 = scalar_lea.sflag [#allocation7], 1
    %515 = vsyncpa %s514, 1
    %516 = vsyncpa [#allocation9], 1
    %s517 = scalar_lea.sflag [#allocation9], 1
    %518 = vsyncpa %s517, 1

</llo_original>
